<compile_context>
chip_gen: v7x
topology: tpu7x:2x2x1
jax: 0.10.0
libtpu: 0.0.40
codegen_flags: <defaults>
</compile_context>

<pallas_src>
import jax
import jax.numpy as jnp
from jax.experimental import pallas as pl
from jax.experimental.pallas import tpu as pltpu


def critic_kernel(x_ref, w1_ref, b1_ref, w2_ref, b2_ref, o_ref):
    # x_ref : (input_dim, tile_b)   streamed activation block (batch in lanes)
    # w1_ref: (hidden, input_dim)   resident, native PyTorch layout
    # b1_ref: (hidden, 1)           resident, broadcasts across lanes
    # w2_ref: (hidden, 1)           resident, broadcasts across lanes
    # b2_ref: (1,) scalar in SMEM
    # o_ref : (1, tile_b)           lane-dense output row
    hT = jnp.dot(w1_ref[...], x_ref[...],
                 preferred_element_type=jnp.float32)          # (hidden, tile_b)
    hT = jnp.maximum(hT + b1_ref[...], 0.0)                   # lane-dense ReLU
    # Layer 2 as VPU multiply + sublane reduce (hidden is small) instead of an
    # M=1 MXU matmul.
    out_row = jnp.sum(w2_ref[...] * hT, axis=0, keepdims=True)  # (1, tile_b)
    o_ref[...] = (out_row + b2_ref[0]).astype(o_ref.dtype)


def critic_forward(x, w1, b1, w2, b2, *, block_b=32768):
    """x: (B, input_dim); PyTorch-convention weights:
       w1 (hidden, input_dim), b1 (hidden,), w2 (1, hidden), b2 (1,).
       Returns (B, 1) float32."""
    B, input_dim = x.shape
    hidden_dim = w1.shape[0]

    # Weight prep: keep w1 native; make biases / w2 lane-broadcastable columns.
    w1_f = jnp.asarray(w1, jnp.float32)                       # (hidden, input)
    b1_col = jnp.asarray(b1, jnp.float32).reshape(hidden_dim, 1)
    w2_col = jnp.asarray(w2, jnp.float32).reshape(hidden_dim, 1)
    b2_1d = jnp.asarray(b2, jnp.float32).reshape(1)           # scalar via SMEM

    # Batch tiling: pad B to a multiple of 128 lanes; prefer >= 2 grid tiles
    # (v7x megacore split) while keeping tiles as large as block_b allows.
    b_pad128 = pl.cdiv(B, 128) * 128
    if b_pad128 >= 256:
        half = pl.cdiv(b_pad128 // 2, 128) * 128
        tile_b = min(block_b, half)
    else:
        tile_b = b_pad128
    b_pad = pl.cdiv(b_pad128, tile_b) * tile_b
    num_tiles = b_pad // tile_b

    x_pad = x if b_pad == B else jnp.pad(x, ((0, b_pad - B), (0, 0)))
    # Batch-in-lanes layout for the kernel.
    xT = jnp.asarray(x_pad, jnp.float32).T                    # (input_dim, b_pad)

    out_rows = pl.pallas_call(
        critic_kernel,
        out_shape=jax.ShapeDtypeStruct((num_tiles, tile_b), jnp.float32),
        grid=(num_tiles,),
        in_specs=[
            pl.BlockSpec((input_dim, tile_b), lambda i: (0, i)),       # stream x
            pl.BlockSpec((hidden_dim, input_dim), lambda i: (0, 0)),   # resident
            pl.BlockSpec((hidden_dim, 1), lambda i: (0, 0)),           # resident
            pl.BlockSpec((hidden_dim, 1), lambda i: (0, 0)),           # resident
            pl.BlockSpec(memory_space=pltpu.MemorySpace.SMEM),         # b2 scalar
        ],
        out_specs=pl.BlockSpec((1, tile_b), lambda i: (i, 0)),
        compiler_params=pltpu.CompilerParams(
            dimension_semantics=("parallel",),
            vmem_limit_bytes=48 * 1024 * 1024),
    )(xT, w1_f, b1_col, w2_col, b2_1d)

    # Free layout plumbing: (num_tiles, tile_b) -> (B, 1)
    return out_rows.reshape(b_pad)[:B].reshape(B, 1)


def init_params(key, input_dim, hidden_dim):
    """Deterministic PyTorch-style (uniform fan-in) init for both Linear layers."""
    k1, k2, k3, k4 = jax.random.split(key, 4)
    bound1 = 1.0 / jnp.sqrt(input_dim)
    bound2 = 1.0 / jnp.sqrt(hidden_dim)
    w1 = jax.random.uniform(k1, (hidden_dim, input_dim), jnp.float32, -bound1, bound1)
    b1 = jax.random.uniform(k2, (hidden_dim,), jnp.float32, -bound1, bound1)
    w2 = jax.random.uniform(k3, (1, hidden_dim), jnp.float32, -bound2, bound2)
    b2 = jax.random.uniform(k4, (1,), jnp.float32, -bound2, bound2)
    return w1, b1, w2, b2


def _reference(x, w1, b1, w2, b2):
    return jnp.maximum(x @ w1.T + b1, 0.0) @ w2.T + b2


if __name__ == "__main__":
    key = jax.random.PRNGKey(0)
    kx, kp, kx2 = jax.random.split(key, 3)

    # CartPole-style shapes: observation dim 4, small hidden layer, small batch.
    batch, input_dim, hidden_dim = 8, 4, 32
    x = jax.random.normal(kx, (batch, input_dim), jnp.float32)
    w1, b1, w2, b2 = init_params(kp, input_dim, hidden_dim)

    out = critic_forward(x, w1, b1, w2, b2)
    out = jax.block_until_ready(out)
    ref = _reference(x, w1, b1, w2, b2)
    assert out.shape == (batch, 1)
    assert jnp.allclose(out, ref, atol=1e-5, rtol=1e-5)

    # Larger-batch check: exercises the multi-tile (>= 2 grid steps) path.
    big_batch = 4096
    x_big = jax.random.normal(kx2, (big_batch, input_dim), jnp.float32)
    out_big = jax.block_until_ready(critic_forward(x_big, w1, b1, w2, b2))
    ref_big = _reference(x_big, w1, b1, w2, b2)
    assert out_big.shape == (big_batch, 1)
    assert jnp.allclose(out_big, ref_big, atol=1e-4, rtol=1e-4)

    print("KERNEL_OK")
</pallas_src>

<mosaic_0001>
module attributes {stable_mosaic.version = 11 : i64} {
  func.func @critic_kernel(%arg0: i32, %arg1: memref<4x128xf32, #tpu.memory_space<vmem>>, %arg2: memref<32x4xf32, #tpu.memory_space<vmem>>, %arg3: memref<32x1xf32, #tpu.memory_space<vmem>>, %arg4: memref<32x1xf32, #tpu.memory_space<vmem>>, %arg5: memref<1xf32, #tpu.memory_space<smem>>, %arg6: memref<1x128xf32, #tpu.memory_space<vmem>>) attributes {dimension_semantics = [#tpu.dimension_semantics<parallel>], iteration_bounds = array<i64: 1>, scalar_prefetch = 0 : i64, scratch_operands = 0 : i64, tpu.core_type = #tpu.core_type<tc>, window_params = [{transform_indices = @transform_0, window_bounds = array<i64: 4, 128>}, {pipeline_mode = #tpu.pipeline_mode<synchronous>, transform_indices = @transform_1, window_bounds = array<i64: 32, 4>}, {pipeline_mode = #tpu.pipeline_mode<synchronous>, transform_indices = @transform_2, window_bounds = array<i64: 32, 1>}, {pipeline_mode = #tpu.pipeline_mode<synchronous>, transform_indices = @transform_3, window_bounds = array<i64: 32, 1>}, {transform_indices = @transform_4, window_bounds = array<i64: 1>}, {transform_indices = @transform_5, window_bounds = array<i64: 1, 128>}]} {
    %c0 = arith.constant 0 : index
    %c0_0 = arith.constant 0 : index
    %0 = vector.load %arg2[%c0, %c0_0] : memref<32x4xf32, #tpu.memory_space<vmem>>, vector<32x4xf32>
    %c0_1 = arith.constant 0 : index
    %c0_2 = arith.constant 0 : index
    %1 = vector.load %arg1[%c0_1, %c0_2] : memref<4x128xf32, #tpu.memory_space<vmem>>, vector<4x128xf32>
    %cst = arith.constant dense<0.000000e+00> : vector<32x128xf32>
    %2 = tpu.matmul %0, %1, %cst {dimension_numbers = #tpu.dot_dimension_numbers<[1], [0], [0], [1], [0, 0, 1, 1], [], []>} : vector<32x4xf32>, vector<4x128xf32>, vector<32x128xf32> -> vector<32x128xf32>
    %c0_3 = arith.constant 0 : index
    %c0_4 = arith.constant 0 : index
    %3 = vector.load %arg3[%c0_3, %c0_4] : memref<32x1xf32, #tpu.memory_space<vmem>>, vector<32x1xf32>
    %4 = vector.broadcast %3 : vector<32x1xf32> to vector<32x128xf32>
    %5 = arith.addf %2, %4 : vector<32x128xf32>
    %cst_5 = arith.constant 0.000000e+00 : f32
    %6 = vector.broadcast %cst_5 : f32 to vector<32x128xf32>
    %7 = arith.maximumf %5, %6 : vector<32x128xf32>
    %c0_6 = arith.constant 0 : index
    %c0_7 = arith.constant 0 : index
    %8 = vector.load %arg4[%c0_6, %c0_7] : memref<32x1xf32, #tpu.memory_space<vmem>>, vector<32x1xf32>
    %9 = vector.broadcast %8 : vector<32x1xf32> to vector<32x128xf32>
    %10 = arith.mulf %9, %7 : vector<32x128xf32>
    %cst_8 = arith.constant dense<0.000000e+00> : vector<128xf32>
    %11 = vector.multi_reduction <add>, %10, %cst_8 [0] : vector<32x128xf32> to vector<128xf32>
    %12 = vector.shape_cast %11 : vector<128xf32> to vector<1x128xf32>
    %c0_9 = arith.constant 0 : index
    %13 = memref.load %arg5[%c0_9] : memref<1xf32, #tpu.memory_space<smem>>
    %14 = vector.broadcast %13 : f32 to vector<1x128xf32>
    %15 = arith.addf %12, %14 : vector<1x128xf32>
    %c0_10 = arith.constant 0 : index
    %c0_11 = arith.constant 0 : index
    %16 = vector.load %arg6[%c0_10, %c0_11] : memref<1x128xf32, #tpu.memory_space<vmem>>, vector<1x128xf32>
    tpu.vector_store %arg6[%c0_10, %c0_11], %15 {strides = array<i32>} : memref<1x128xf32, #tpu.memory_space<vmem>>, vector<1x128xf32>,
    return
  }
  func.func @transform_0(%arg0: i32) -> (i32, i32) {
    %c0_i32 = arith.constant 0 : i32
    %c0_i32_0 = arith.constant 0 : i32
    return %c0_i32, %arg0 : i32, i32
  }
  func.func @transform_1(%arg0: i32) -> (i32, i32) {
    %c0_i32 = arith.constant 0 : i32
    %c0_i32_0 = arith.constant 0 : i32
    %c0_i32_1 = arith.constant 0 : i32
    return %c0_i32, %c0_i32_0 : i32, i32
  }
  func.func @transform_2(%arg0: i32) -> (i32, i32) {
    %c0_i32 = arith.constant 0 : i32
    %c0_i32_0 = arith.constant 0 : i32
    %c0_i32_1 = arith.constant 0 : i32
    return %c0_i32, %c0_i32_0 : i32, i32
  }
  func.func @transform_3(%arg0: i32) -> (i32, i32) {
    %c0_i32 = arith.constant 0 : i32
    %c0_i32_0 = arith.constant 0 : i32
    %c0_i32_1 = arith.constant 0 : i32
    return %c0_i32, %c0_i32_0 : i32, i32
  }
  func.func @transform_4(%arg0: i32) -> i32 {
    %c0_i32 = arith.constant 0 : i32
    %c0_i32_0 = arith.constant 0 : i32
    return %c0_i32 : i32
  }
  func.func @transform_5(%arg0: i32) -> (i32, i32) {
    %c0_i32 = arith.constant 0 : i32
    %c0_i32_0 = arith.constant 0 : i32
    return %arg0, %c0_i32 : i32, i32
  }
}

</mosaic_0001>

<llo_original>
// kernel: tpu_custom_call.1
$region0: #{tpu_custom_call.1}
  #allocation0 [shape = 'u32[]', space=smem, size = 0x4, offset = 0x4, fixed_abs, tag = 'smem constant byte address 0x4 - core index']
  #allocation1 [shape = 'u32[144,128]{1,0:T(1,128)}', space=vmem, size = 0x12000, scoped, tag = 'internal scratch']
  #allocation2 [shape = 'f32[1]{0:T(128)S(6)}', space=smem, size = 0x200, scoped, tag = 'scoped memory for tpu_custom_call.1']
  %s0 = inlined_call_operand.vmem [shape: f32[4,128], index: 0, kind: input, shape index: {}]
  %s1 = inlined_call_operand.vmem [shape: f32[32,4], index: 1, kind: input, shape index: {}]
  %s2 = inlined_call_operand.vmem [shape: f32[32,1], index: 2, kind: input, shape index: {}]
  %s3 = inlined_call_operand.vmem [shape: f32[32,1], index: 3, kind: input, shape index: {}]
  %s4 = inlined_call_operand.<no memory space> [shape: f32[1], index: 4, kind: input, shape index: {}]
  %s5 = inlined_call_operand.hbm [shape: f32[1,128], index: 5, kind: output, shape index: {}]
  %s6 = sld [smem:[#allocation0]]
  $region30: #{tpu_custom_call.1} parent=0
    _
  %s8 = ssub.s32 1, %s6
  %s9 = scalar_select 0, %s8, %s6
  %10 = sst [smem:[#allocation2]] %s4
  $region1: #{tpu_custom_call.1} parent=0
    #allocation3 [shape = 'u8[512]{0}', space=vmem, size = 0x400, scoped, tag = 'output window, operand 0, single buffered']
    #allocation4 [shape = 's32[1]{0}', space=sflag, size = 0x4, scoped, tag = 'scoped memory for tpu_custom_call.1']
    %11 = vsyncpa [#allocation4], 0
    // Predicated region
    $region2: #{tpu_custom_call.1} parent=1 // pred_check
      _
    $region3: #{tpu_custom_call.1} parent=1 // pred_check_branch
      %13 = sbr.rel (0) target = $region5
    $region4: #{tpu_custom_call.1} parent=1 // pred_region
      _
    $region5: #{tpu_custom_call.1} parent=1 // pred_fallthru
      _
    // Predicated region
    $region6: #{tpu_custom_call.1} parent=1 // pred_check
      _
    $region7: #{tpu_custom_call.1} parent=1 // pred_check_branch
      %15 = sbr.rel (0) target = $region9
    $region8: #{tpu_custom_call.1} parent=1 // pred_region
      _
    $region9: #{tpu_custom_call.1} parent=1 // pred_fallthru
      _
    // Predicated region
    $region10: #{tpu_custom_call.1} parent=1 // pred_check
      _
    $region11: #{tpu_custom_call.1} parent=1 // pred_check_branch
      %17 = sbr.rel (0) target = $region13
    $region12: #{tpu_custom_call.1} parent=1 // pred_region
      _
    $region13: #{tpu_custom_call.1} parent=1 // pred_fallthru
      _
    // Predicated region
    $region14: #{tpu_custom_call.1} parent=1 // pred_check
      _
    $region15: #{tpu_custom_call.1} parent=1 // pred_check_branch
      %19 = sbr.rel (0) target = $region17
    $region16: #{tpu_custom_call.1} parent=1 // pred_region
      _
    $region17: #{tpu_custom_call.1} parent=1 // pred_fallthru
      _
    // Predicated region
    $region18: #{tpu_custom_call.1} parent=1 // pred_check
      _
    $region19: #{tpu_custom_call.1} parent=1 // pred_check_branch
      %21 = sbr.rel (0) target = $region21
    $region20: #{tpu_custom_call.1} parent=1 // pred_region
      _
    $region21: #{tpu_custom_call.1} parent=1 // pred_fallthru
      _
    %v22 = vld [vmem:[%s1] sm:$0xff]
    %v23 = vld [vmem:[%s1 + $0x8] sm:$0xff]
    %v24 = vld [vmem:[%s1 + $0x10] sm:$0xff]
    %v25 = vld [vmem:[%s1 + $0x18] sm:$0xff]
    %v26 = vld [vmem:[%s0] sm:$0xf]
    %v27 = vld [vmem:[%s2] sm:$0xff]
    %v28 = vld [vmem:[%s2 + $0x8] sm:$0xff]
    %v29 = vld [vmem:[%s2 + $0x10] sm:$0xff]
    %v30 = vld [vmem:[%s2 + $0x18] sm:$0xff]
    %32 = vset.pattern.permute.xlu0 0
    %33 = vperm.xlu0 %32, %v27
    %v34 = vpop.permute.xlu0 %33
    %37 = vset.pattern.permute.xlu0 0
    %38 = vperm.xlu0 %37, %v28
    %v39 = vpop.permute.xlu0 %38
    %42 = vset.pattern.permute.xlu0 0
    %43 = vperm.xlu0 %42, %v29
    %v44 = vpop.permute.xlu0 %43
    %47 = vset.pattern.permute.xlu0 0
    %48 = vperm.xlu0 %47, %v30
    %v49 = vpop.permute.xlu0 %48
    %vm51 = vcmask 31744
    %v53 = vsel %vm51, %v22, 0
    %v56 = vsel %vm51, %v23, 0
    %v59 = vsel %vm51, %v24, 0
    %v62 = vsel %vm51, %v25, 0
    %vm64 = vcmask 1043456
    %v66 = vsel %vm64, %v26, 0
    %68 = vmatprep.subr.mxu0 0.0
    %69 = vmatpush1.msra.mxu0 %v66
    %70 = vmatprep.subr.mxu0 0.0
    %71 = vmatpush1.msra.mxu0 0.0
    %72 = vmatprep.subr.mxu0 0.0
    %73 = vmatpush1.msra.mxu0 0.0
    %74 = vmatprep.subr.mxu0 0.0
    %75 = vmatpush1.msra.mxu0 0.0
    %76 = vmatprep.subr.mxu0 0.0
    %77 = vmatpush1.msra.mxu0 0.0
    %78 = vmatprep.subr.mxu0 0.0
    %79 = vmatpush1.msra.mxu0 0.0
    %80 = vmatprep.subr.mxu0 0.0
    %81 = vmatpush1.msra.mxu0 0.0
    %82 = vmatprep.subr.mxu0 0.0
    %83 = vmatpush1.msra.mxu0 0.0
    %84 = vmatprep.subr.mxu0 0.0
    %85 = vmatpush1.msra.mxu0 0.0
    %86 = vmatprep.subr.mxu0 0.0
    %87 = vmatpush1.msra.mxu0 0.0
    %88 = vmatprep.subr.mxu0 0.0
    %89 = vmatpush1.msra.mxu0 0.0
    %90 = vmatprep.subr.mxu0 0.0
    %91 = vmatpush1.msra.mxu0 0.0
    %92 = vmatprep.subr.mxu0 0.0
    %93 = vmatpush1.msra.mxu0 0.0
    %94 = vmatprep.subr.mxu0 0.0
    %95 = vmatpush1.msra.mxu0 0.0
    %96 = vmatprep.subr.mxu0 0.0
    %97 = vmatpush1.msra.mxu0 0.0
    %98 = vmatprep.subr.mxu0 0.0
    %99 = vmatpush1.msra.mxu0 0.0
    %100 = vmatprep.subr.mxu0 0.0
    %101 = vmatpush1.msra.mxu0 0.0
    %102 = vmatprep.subr.mxu0 0.0
    %103 = vmatpush1.msra.mxu0 0.0
    %104 = vmatprep.subr.mxu0 0.0
    %105 = vmatpush1.msra.mxu0 0.0
    %106 = vmatprep.subr.mxu0 0.0
    %107 = vmatpush1.msra.mxu0 0.0
    %108 = vmatprep.subr.mxu0 0.0
    %109 = vmatpush1.msra.mxu0 0.0
    %110 = vmatprep.subr.mxu0 0.0
    %111 = vmatpush1.msra.mxu0 0.0
    %112 = vmatprep.subr.mxu0 0.0
    %113 = vmatpush1.msra.mxu0 0.0
    %114 = vmatprep.subr.mxu0 0.0
    %115 = vmatpush1.msra.mxu0 0.0
    %116 = vmatprep.subr.mxu0 0.0
    %117 = vmatpush1.msra.mxu0 0.0
    %118 = vmatprep.subr.mxu0 0.0
    %119 = vmatpush1.msra.mxu0 0.0
    %120 = vmatprep.subr.mxu0 0.0
    %121 = vmatpush1.msra.mxu0 0.0
    %122 = vmatprep.subr.mxu0 0.0
    %123 = vmatpush1.msra.mxu0 0.0
    %124 = vmatprep.subr.mxu0 0.0
    %125 = vmatpush1.msra.mxu0 0.0
    %126 = vmatprep.subr.mxu0 0.0
    %127 = vmatpush1.msra.mxu0 0.0
    %128 = vmatprep.subr.mxu0 0.0
    %129 = vmatpush1.msra.mxu0 0.0
    %130 = vmatprep.subr.mxu0 0.0
    %131 = vmatpush1.msra.mxu0 0.0
    %132 = vmatprep.mubr.f32.mxu0 0.0
    %133 = vmatmul.mubr.f32.gmra.mrb[0].mxu0 %v53
    %v134 = vpop.f32.mrb[0].mxu0
    %v135 = vadd.f32 %v34, %v134
    %v136 = vpop.f32.mrb[0].mxu0
    %137 = vmatprep.mubr.f32.mxu0 0.0
    %138 = vmatmul.mubr.f32.gmra.mrb[0].mxu0 %v56
    %v139 = vpop.f32.mrb[0].mxu0
    %v140 = vadd.f32 %v39, %v139
    %v141 = vpop.f32.mrb[0].mxu0
    %142 = vmatprep.mubr.f32.mxu0 0.0
    %143 = vmatmul.mubr.f32.gmra.mrb[0].mxu0 %v59
    %v144 = vpop.f32.mrb[0].mxu0
    %v145 = vadd.f32 %v44, %v144
    %v146 = vpop.f32.mrb[0].mxu0
    %147 = vmatprep.mubr.f32.mxu0 0.0
    %148 = vmatmul.mubr.f32.gmra.mrb[0].mxu0 %v62
    %v149 = vpop.f32.mrb[0].mxu0
    %v150 = vadd.f32 %v49, %v149
    %v151 = vpop.f32.mrb[0].mxu0
    %152 = vdwg.mxu0
    %v153 = vmax.f32 %v135, 0.0
    %v154 = vmax.f32 %v140, 0.0
    %v155 = vmax.f32 %v145, 0.0
    %v156 = vmax.f32 %v150, 0.0
    %v157 = vld [vmem:[%s3] sm:$0xff]
    %v158 = vld [vmem:[%s3 + $0x8] sm:$0xff]
    %v159 = vld [vmem:[%s3 + $0x10] sm:$0xff]
    %v160 = vld [vmem:[%s3 + $0x18] sm:$0xff]
    %162 = vset.pattern.permute.xlu0 0
    %163 = vperm.xlu0 %162, %v157
    %v164 = vpop.permute.xlu0 %163
    %167 = vset.pattern.permute.xlu0 0
    %168 = vperm.xlu0 %167, %v158
    %v169 = vpop.permute.xlu0 %168
    %172 = vset.pattern.permute.xlu0 0
    %173 = vperm.xlu0 %172, %v159
    %v174 = vpop.permute.xlu0 %173
    %177 = vset.pattern.permute.xlu0 0
    %178 = vperm.xlu0 %177, %v160
    %v179 = vpop.permute.xlu0 %178
    %v181 = vmul.f32 %v164, %v153
    %v182 = vmul.f32 %v169, %v154
    %v183 = vmul.f32 %v174, %v155
    %v184 = vmul.f32 %v179, %v156
    %v185 = vadd.f32 %v181, %v182
    %v186 = vadd.f32 %v185, %v183
    %v187 = vadd.f32 %v186, %v184
    %v188 = vrot.slane %v187, 4
    %v189 = vadd.f32 %v187, %v188
    %v190 = vrot.slane %v189, 2
    %v191 = vadd.f32 %v189, %v190
    %v192 = vrot.slane %v191, 1
    %v193 = vadd.f32 %v191, %v192
    %s194 = sld [smem:[#allocation2]]
    %v195 = vstv %s194
    %v196 = vadd.f32 %v193, %v195
    %197 = vst [vmem:[#allocation3] sm:$0x1] %v196
    // Predicated region
    $region22: #{tpu_custom_call.1} parent=1 // pred_check
      _
    $region23: #{tpu_custom_call.1} parent=1 // pred_check_branch
      %199 = sbr.rel (0) target = $region25
    $region24: #{tpu_custom_call.1} parent=1 // pred_region
      %s201 = ssub.s32 16, 16
      %202 = vsyncadd [#allocation4], %s201
      %s204 = sshll.u32 [#allocation3], 4
      %s205 = int_to_ptr.vmem [resolvable:$true] %s204
      %207 = dma.vmem_to_hbm [thread:$0]  %s205, 16, %s5, [#allocation4]
    $region25: #{tpu_custom_call.1} parent=1 // pred_fallthru
      _
    // Predicated region
    $region26: #{tpu_custom_call.1} parent=1 // pred_check
      _
    $region27: #{tpu_custom_call.1} parent=1 // pred_check_branch
      %209 = sbr.rel (0) target = $region29
    $region28: #{tpu_custom_call.1} parent=1 // pred_region
      %210 = dma.done [#allocation4], 16
    $region29: #{tpu_custom_call.1} parent=1 // pred_fallthru
      _
    %211 = vsyncpa [#allocation4], 1

</llo_original>
